<compile_context>
chip_gen: v7x
topology: tpu7x:2x2x1
jax: 0.10.0
libtpu: 0.0.40
codegen_flags: <defaults>
</compile_context>

<pallas_src>
import jax
import jax.numpy as jnp
import numpy as np
from jax.experimental import pallas as pl
from jax.experimental.pallas import tpu as pltpu


def _bidaf_kernel(c_ref, q_ref, cmb_ref, qmb_ref, w_ref, out_ref):
    """One grid step: (Bt, Lc, H) context block vs (Bt, Lq, H) query block."""
    H = c_ref.shape[-1]
    f32 = jnp.float32
    bf16 = jnp.bfloat16

    c_bf = c_ref[...]                      # (Bt, Lc, H) bf16
    q_bf = q_ref[...]                      # (Bt, Lq, H) bf16
    c = c_bf.astype(f32)
    q = q_bf.astype(f32)
    cm_bias = cmb_ref[...]                 # (Bt, Lc, 1) f32: +bias valid / -1e30 pad
    qm_bias = qmb_ref[...]                 # (Bt, 1, Lq) f32: +bias valid / -1e30 pad
    w = w_ref[...]                         # (3, H) f32: [c_weight; q_weight; cq_weight]
    cw = w[0:1]                            # (1, H) — broadcasts over (Bt, Lc, H)
    qw = w[1:2]
    cqw = w[2:3]

    # ---- similarity matrix (memory-efficient BiDAF form) ----
    # rank-1 terms on the VPU/XLU (no N=1 MXU matmuls)
    s0 = jnp.sum(c * cw, axis=-1, keepdims=True)                        # (Bt, Lc, 1)
    s1 = jnp.transpose(jnp.sum(q * qw, axis=-1, keepdims=True),
                       (0, 2, 1))                                       # (Bt, 1, Lq)
    # main term on the MXU: bf16 operands, fp32 accumulation, no explicit q^T
    s2 = jnp.einsum("bch,bqh->bcq", (c * cqw).astype(bf16), q_bf,
                    preferred_element_type=f32)                         # (Bt, Lc, Lq)
    # NOTE: the scalar bias is folded into the additive mask biases in the
    # wrapper (softmax only ever consumes s + mask_bias), so it is not added here.
    s = s2 + s0 + s1

    # ---- masked softmaxes (additive -1e30 masks; exact denominators) ----
    ls1 = s + qm_bias                                   # query axis (torch dim=2)
    ls1 = ls1 - jnp.max(ls1, axis=2, keepdims=True)
    e1 = jnp.exp(ls1)
    p1 = e1 / jnp.sum(e1, axis=2, keepdims=True)

    ls2 = s + cm_bias                                   # context axis (torch dim=1)
    ls2 = ls2 - jnp.max(ls2, axis=1, keepdims=True)
    e2 = jnp.exp(ls2)
    p2 = e2 / jnp.sum(e2, axis=1, keepdims=True)

    # ---- attended vectors ----
    # q2c path reassociated: b = p1 @ (p2^T @ c) — no (Lc, Lc) temp — and the
    # two p1 matmuls fused into a single N=2H MXU contraction.
    t = jnp.einsum("bcq,bch->bqh", p2.astype(bf16), c_bf,
                   preferred_element_type=f32)                          # (Bt, Lq, H)
    rhs = jnp.concatenate([q_bf, t.astype(bf16)], axis=-1)              # (Bt, Lq, 2H)
    ab = jnp.einsum("bcq,bqh->bch", p1.astype(bf16), rhs,
                    preferred_element_type=f32)                         # (Bt, Lc, 2H)
    a = ab[:, :, :H]
    b = ab[:, :, H:]

    # ---- write the four H-wide, lane-aligned chunks (no concat temp) ----
    od = out_ref.dtype
    # TODO(synk): optionally skip / alias this verbatim copy of c (25% of the
    # output bytes) if the downstream consumer can read c from the input.
    out_ref[:, :, 0:H] = c_bf.astype(od)
    out_ref[:, :, H:2 * H] = a.astype(od)
    out_ref[:, :, 2 * H:3 * H] = (c * a).astype(od)
    out_ref[:, :, 3 * H:4 * H] = (c * b).astype(od)


def _vmem_capacity_bytes():
    """Per-core VMEM capacity, with a conservative fallback (v7x: 64 MiB)."""
    try:
        cap = getattr(pltpu.get_tpu_info(), "vmem_capacity_bytes", None)
        if cap:
            return int(cap)
    except Exception:
        pass
    return 64 * 1024 * 1024


def bidaf_attention(c, q, c_mask, q_mask, c_weight, q_weight, cq_weight, bias,
                    *, out_dtype=jnp.bfloat16, io_dtype=jnp.bfloat16):
    """BiDAF attention forward (eval mode).

    c: (B, Lc, H), q: (B, Lq, H), c_mask: (B, Lc), q_mask: (B, Lq).
    Returns (B, Lc, 4*H) in `out_dtype` (bf16 by default: the kernel is
    HBM-bound, so halving the output bytes is the dominant lever).
    """
    B, Lc, H = c.shape
    Lq = q.shape[1]
    f32 = jnp.float32

    # bf16 streaming I/O; fp32 math inside the kernel where it matters.
    c_in = c.astype(io_dtype)
    q_in = q.astype(io_dtype)

    # Additive softmax mask biases with the scalar bias folded in.  This is
    # exact: softmax is invariant to terms constant along its axis, and in
    # fp32  (logit + bias) - 1e30  rounds to exactly -1e30, matching
    # masked_fill(-1e30) for padded positions (including fully-padded rows).
    bias_f = jnp.asarray(bias, f32).reshape(())
    cm_bias = ((c_mask.astype(f32) - 1.0) * 1e30 + bias_f).reshape(B, Lc, 1)
    qm_bias = ((q_mask.astype(f32) - 1.0) * 1e30 + bias_f).reshape(B, 1, Lq)

    # Stack the three per-feature weights into one small (3, H) block.
    w = jnp.concatenate([c_weight.reshape(1, H),
                         q_weight.reshape(1, H),
                         cq_weight.reshape(1, H)], axis=0).astype(f32)

    # ---- generation-aware VMEM budget and batch-block size ----
    cap = _vmem_capacity_bytes()
    budget = max(32 * 1024 * 1024,
                 min(cap - 16 * 1024 * 1024, 100 * 1024 * 1024))

    in_b = jnp.dtype(io_dtype).itemsize
    out_b = jnp.dtype(out_dtype).itemsize
    # Double-buffered pipeline blocks + generous fp32 in-kernel temporaries.
    blocks_per_b = 2 * (in_b * (Lc * H + Lq * H) + 4 * (Lc + Lq)
                        + out_b * Lc * 4 * H)
    temps_per_b = 4 * (20 * Lc * Lq + 22 * Lc * H + 14 * Lq * H)
    per_batch = blocks_per_b + temps_per_b

    bt = max(1, min(B, budget // per_batch))
    if B > 1:
        # keep at least two grid steps so both v7x TensorCores get work
        bt = min(bt, (B + 1) // 2)
    bt = int(bt)
    while B % bt:
        bt -= 1
    nb = B // bt

    grid_spec = pltpu.PrefetchScalarGridSpec(
        num_scalar_prefetch=0,
        grid=(nb,),
        in_specs=[
            pl.BlockSpec((bt, Lc, H), lambda i: (i, 0, 0)),      # c (bf16)
            pl.BlockSpec((bt, Lq, H), lambda i: (i, 0, 0)),      # q (bf16)
            pl.BlockSpec((bt, Lc, 1), lambda i: (i, 0, 0)),      # c additive mask
            pl.BlockSpec((bt, 1, Lq), lambda i: (i, 0, 0)),      # q additive mask
            pl.BlockSpec((3, H), lambda i: (0, 0)),              # stacked weights
        ],
        out_specs=pl.BlockSpec((bt, Lc, 4 * H), lambda i: (i, 0, 0)),
    )

    return pl.pallas_call(
        _bidaf_kernel,
        out_shape=jax.ShapeDtypeStruct((B, Lc, 4 * H), out_dtype),
        grid_spec=grid_spec,
        compiler_params=pltpu.CompilerParams(
            dimension_semantics=("parallel",),
            vmem_limit_bytes=int(budget)),
    )(c_in, q_in, cm_bias, qm_bias, w)


def _reference(c, q, c_mask, q_mask, cw, qw, cqw, bias):
    """Pure-JAX reference mirroring the PyTorch forward (eval mode) at the
    kernel's precision: bf16 streaming inputs, bf16 MXU operands, f32 accumulate."""
    f32, bf16 = jnp.float32, jnp.bfloat16
    B, Lc, H = c.shape
    Lq = q.shape[1]
    cf = c.astype(bf16).astype(f32)      # mirror the wrapper's bf16 input cast
    qf = q.astype(bf16).astype(f32)
    cwv = cw.reshape(1, 1, H).astype(f32)
    qwv = qw.reshape(1, 1, H).astype(f32)
    cqwv = cqw.reshape(1, 1, H).astype(f32)

    s0 = jnp.sum(cf * cwv, axis=-1, keepdims=True)                       # (B,Lc,1)
    s1 = jnp.swapaxes(jnp.sum(qf * qwv, axis=-1, keepdims=True), 1, 2)   # (B,1,Lq)
    s2 = jnp.einsum("bch,bqh->bcq", (cf * cqwv).astype(bf16),
                    qf.astype(bf16), preferred_element_type=f32)
    s = s0 + s1 + s2 + bias.astype(f32)

    qm = q_mask.astype(f32).reshape(B, 1, Lq)
    cm = c_mask.astype(f32).reshape(B, Lc, 1)
    p1 = jax.nn.softmax(jnp.where(qm != 0.0, s, -1e30), axis=2)
    p2 = jax.nn.softmax(jnp.where(cm != 0.0, s, -1e30), axis=1)

    a = jnp.einsum("bcq,bqh->bch", p1.astype(bf16), qf.astype(bf16),
                   preferred_element_type=f32)
    t = jnp.einsum("bcq,bch->bqh", p2.astype(bf16), cf.astype(bf16),
                   preferred_element_type=f32)
    b = jnp.einsum("bcq,bqh->bch", p1.astype(bf16), t.astype(bf16),
                   preferred_element_type=f32)
    return jnp.concatenate([cf, a, cf * a, cf * b], axis=2)


if __name__ == "__main__":
    # Small deterministic example: B=4 (exercises Bt=2 batch blocking with a
    # 2-step "parallel" grid), c_len=16, q_len=8, H=128.
    key = jax.random.PRNGKey(0)
    B, Lc, Lq, H = 4, 16, 8, 128
    k_c, k_q, k_cw, k_qw, k_cqw = jax.random.split(key, 5)

    c = jax.random.normal(k_c, (B, Lc, H), dtype=jnp.float32)
    q = jax.random.normal(k_q, (B, Lq, H), dtype=jnp.float32)

    # masks: first few positions valid, rest padded
    c_lens = jnp.array([Lc, Lc - 5, Lc, Lc - 9], dtype=jnp.int32)
    q_lens = jnp.array([Lq, Lq - 3, Lq - 1, Lq], dtype=jnp.int32)
    c_mask = (jnp.arange(Lc)[None, :] < c_lens[:, None]).astype(jnp.float32)
    q_mask = (jnp.arange(Lq)[None, :] < q_lens[:, None]).astype(jnp.float32)

    # Deterministic xavier-uniform-style parameter init (shapes from __init__).
    bound_vec = float(np.sqrt(6.0 / (H + 1)))   # for (H, 1) weights
    bound_cq = float(np.sqrt(6.0 / (2 * H)))    # for (1, 1, H) weight
    c_weight = jax.random.uniform(k_cw, (H, 1), jnp.float32, -bound_vec, bound_vec)
    q_weight = jax.random.uniform(k_qw, (H, 1), jnp.float32, -bound_vec, bound_vec)
    cq_weight = jax.random.uniform(k_cqw, (1, 1, H), jnp.float32, -bound_cq, bound_cq)
    bias = jnp.full((1,), 0.25, jnp.float32)     # non-zero to exercise the bias path

    out = bidaf_attention(c, q, c_mask, q_mask,
                          c_weight, q_weight, cq_weight, bias)
    out = jax.block_until_ready(out)

    ref = _reference(c, q, c_mask, q_mask, c_weight, q_weight, cq_weight, bias)
    assert out.shape == (B, Lc, 4 * H)
    assert out.dtype == jnp.bfloat16
    # Tolerance covers the bf16 output quantization + bf16 MXU rounding.
    np.testing.assert_allclose(np.asarray(out.astype(jnp.float32)),
                               np.asarray(ref),
                               rtol=3e-2, atol=3e-2)
    print("KERNEL_OK")
</pallas_src>

<mosaic_0001>
module attributes {stable_mosaic.version = 11 : i64} {
  func.func @_bidaf_kernel(%arg0: i32, %arg1: memref<2x16x128xbf16, #tpu.memory_space<vmem>>, %arg2: memref<2x8x128xbf16, #tpu.memory_space<vmem>>, %arg3: memref<2x16x1xf32, #tpu.memory_space<vmem>>, %arg4: memref<2x1x8xf32, #tpu.memory_space<vmem>>, %arg5: memref<3x128xf32, #tpu.memory_space<vmem>>, %arg6: memref<2x16x512xbf16, #tpu.memory_space<vmem>>) attributes {dimension_semantics = [#tpu.dimension_semantics<parallel>], iteration_bounds = array<i64: 2>, scalar_prefetch = 0 : i64, scratch_operands = 0 : i64, tpu.core_type = #tpu.core_type<tc>, window_params = [{transform_indices = @transform_0, window_bounds = array<i64: 2, 16, 128>}, {transform_indices = @transform_1, window_bounds = array<i64: 2, 8, 128>}, {transform_indices = @transform_2, window_bounds = array<i64: 2, 16, 1>}, {transform_indices = @transform_3, window_bounds = array<i64: 2, 1, 8>}, {pipeline_mode = #tpu.pipeline_mode<synchronous>, transform_indices = @transform_4, window_bounds = array<i64: 3, 128>}, {transform_indices = @transform_5, window_bounds = array<i64: 2, 16, 512>}]} {
    %c0 = arith.constant 0 : index
    %c0_0 = arith.constant 0 : index
    %c0_1 = arith.constant 0 : index
    %0 = vector.load %arg1[%c0, %c0_0, %c0_1] : memref<2x16x128xbf16, #tpu.memory_space<vmem>>, vector<2x16x128xbf16>
    %c0_2 = arith.constant 0 : index
    %c0_3 = arith.constant 0 : index
    %c0_4 = arith.constant 0 : index
    %1 = vector.load %arg2[%c0_2, %c0_3, %c0_4] : memref<2x8x128xbf16, #tpu.memory_space<vmem>>, vector<2x8x128xbf16>
    %2 = arith.extf %0 : vector<2x16x128xbf16> to vector<2x16x128xf32>
    %3 = arith.extf %1 : vector<2x8x128xbf16> to vector<2x8x128xf32>
    %c0_5 = arith.constant 0 : index
    %c0_6 = arith.constant 0 : index
    %c0_7 = arith.constant 0 : index
    %4 = vector.load %arg3[%c0_5, %c0_6, %c0_7] : memref<2x16x1xf32, #tpu.memory_space<vmem>>, vector<2x16x1xf32>
    %c0_8 = arith.constant 0 : index
    %c0_9 = arith.constant 0 : index
    %c0_10 = arith.constant 0 : index
    %5 = vector.load %arg4[%c0_8, %c0_9, %c0_10] : memref<2x1x8xf32, #tpu.memory_space<vmem>>, vector<2x1x8xf32>
    %c0_11 = arith.constant 0 : index
    %c0_12 = arith.constant 0 : index
    %6 = vector.load %arg5[%c0_11, %c0_12] : memref<3x128xf32, #tpu.memory_space<vmem>>, vector<3x128xf32>
    %7 = vector.extract_strided_slice %6 {offsets = [0, 0], sizes = [1, 128], strides = [1, 1]} : vector<3x128xf32> to vector<1x128xf32>
    %8 = vector.extract_strided_slice %6 {offsets = [1, 0], sizes = [1, 128], strides = [1, 1]} : vector<3x128xf32> to vector<1x128xf32>
    %9 = vector.extract_strided_slice %6 {offsets = [2, 0], sizes = [1, 128], strides = [1, 1]} : vector<3x128xf32> to vector<1x128xf32>
    %10 = vector.shape_cast %7 : vector<1x128xf32> to vector<1x1x128xf32>
    %11 = vector.broadcast %10 : vector<1x1x128xf32> to vector<2x16x128xf32>
    %12 = arith.mulf %2, %11 : vector<2x16x128xf32>
    %cst = arith.constant dense<0.000000e+00> : vector<2x16xf32>
    %13 = vector.multi_reduction <add>, %12, %cst [2] : vector<2x16x128xf32> to vector<2x16xf32>
    %14 = vector.shape_cast %13 : vector<2x16xf32> to vector<2x16x1xf32>
    %15 = vector.shape_cast %8 : vector<1x128xf32> to vector<1x1x128xf32>
    %16 = vector.broadcast %15 : vector<1x1x128xf32> to vector<2x8x128xf32>
    %17 = arith.mulf %3, %16 : vector<2x8x128xf32>
    %cst_13 = arith.constant dense<0.000000e+00> : vector<2x8xf32>
    %18 = vector.multi_reduction <add>, %17, %cst_13 [2] : vector<2x8x128xf32> to vector<2x8xf32>
    %19 = vector.shape_cast %18 : vector<2x8xf32> to vector<2x8x1xf32>
    %20 = tpu.transpose %19, [0, 2, 1] : vector<2x8x1xf32> -> vector<2x1x8xf32>
    %21 = vector.shape_cast %9 : vector<1x128xf32> to vector<1x1x128xf32>
    %22 = vector.broadcast %21 : vector<1x1x128xf32> to vector<2x16x128xf32>
    %23 = arith.mulf %2, %22 : vector<2x16x128xf32>
    %24 = arith.truncf %23 : vector<2x16x128xf32> to vector<2x16x128xbf16>
    "tpu.trace_start"() <{level = 10 : i32, message = "bch,bqh->bcq"}> : () -> ()
    %cst_14 = arith.constant dense<0.000000e+00> : vector<2x16x8xf32>
    %25 = tpu.matmul %24, %1, %cst_14 {dimension_numbers = #tpu.dot_dimension_numbers<[2], [2], [1], [1], [0, 0, 0, 1, 1, 1], [0], [0]>} : vector<2x16x128xbf16>, vector<2x8x128xbf16>, vector<2x16x8xf32> -> vector<2x16x8xf32>
    "tpu.trace_stop"() : () -> ()
    %26 = vector.broadcast %14 : vector<2x16x1xf32> to vector<2x16x8xf32>
    %27 = arith.addf %25, %26 : vector<2x16x8xf32>
    %28 = vector.broadcast %20 : vector<2x1x8xf32> to vector<2x16x8xf32>
    %29 = arith.addf %27, %28 : vector<2x16x8xf32>
    %30 = vector.broadcast %5 : vector<2x1x8xf32> to vector<2x16x8xf32>
    %31 = arith.addf %29, %30 : vector<2x16x8xf32>
    %cst_15 = arith.constant dense<0xFF800000> : vector<2x16xf32>
    %32 = vector.multi_reduction <maximumf>, %31, %cst_15 [2] : vector<2x16x8xf32> to vector<2x16xf32>
    %33 = vector.shape_cast %32 : vector<2x16xf32> to vector<2x16x1xf32>
    %34 = vector.broadcast %33 : vector<2x16x1xf32> to vector<2x16x8xf32>
    %35 = arith.subf %31, %34 : vector<2x16x8xf32>
    %36 = math.exp %35 : vector<2x16x8xf32>
    %cst_16 = arith.constant dense<0.000000e+00> : vector<2x16xf32>
    %37 = vector.multi_reduction <add>, %36, %cst_16 [2] : vector<2x16x8xf32> to vector<2x16xf32>
    %38 = vector.shape_cast %37 : vector<2x16xf32> to vector<2x16x1xf32>
    %39 = vector.broadcast %38 : vector<2x16x1xf32> to vector<2x16x8xf32>
    %40 = arith.divf %36, %39 : vector<2x16x8xf32>
    %41 = vector.broadcast %4 : vector<2x16x1xf32> to vector<2x16x8xf32>
    %42 = arith.addf %29, %41 : vector<2x16x8xf32>
    %cst_17 = arith.constant dense<0xFF800000> : vector<2x8xf32>
    %43 = vector.multi_reduction <maximumf>, %42, %cst_17 [1] : vector<2x16x8xf32> to vector<2x8xf32>
    %44 = vector.shape_cast %43 : vector<2x8xf32> to vector<2x1x8xf32>
    %45 = vector.broadcast %44 : vector<2x1x8xf32> to vector<2x16x8xf32>
    %46 = arith.subf %42, %45 : vector<2x16x8xf32>
    %47 = math.exp %46 : vector<2x16x8xf32>
    %cst_18 = arith.constant dense<0.000000e+00> : vector<2x8xf32>
    %48 = vector.multi_reduction <add>, %47, %cst_18 [1] : vector<2x16x8xf32> to vector<2x8xf32>
    %49 = vector.shape_cast %48 : vector<2x8xf32> to vector<2x1x8xf32>
    %50 = vector.broadcast %49 : vector<2x1x8xf32> to vector<2x16x8xf32>
    %51 = arith.divf %47, %50 : vector<2x16x8xf32>
    %52 = arith.truncf %51 : vector<2x16x8xf32> to vector<2x16x8xbf16>
    "tpu.trace_start"() <{level = 10 : i32, message = "bcq,bch->bqh"}> : () -> ()
    %cst_19 = arith.constant dense<0.000000e+00> : vector<2x8x128xf32>
    %53 = tpu.matmul %52, %0, %cst_19 {dimension_numbers = #tpu.dot_dimension_numbers<[1], [1], [2], [2], [0, 0, 0, 2, 1, 2], [0], [0]>} : vector<2x16x8xbf16>, vector<2x16x128xbf16>, vector<2x8x128xf32> -> vector<2x8x128xf32>
    "tpu.trace_stop"() : () -> ()
    %54 = arith.truncf %53 : vector<2x8x128xf32> to vector<2x8x128xbf16>
    %55 = tpu.concatenate %1, %54 in 2 : vector<2x8x128xbf16>, vector<2x8x128xbf16> -> vector<2x8x256xbf16>
    %56 = arith.truncf %40 : vector<2x16x8xf32> to vector<2x16x8xbf16>
    "tpu.trace_start"() <{level = 10 : i32, message = "bcq,bqh->bch"}> : () -> ()
    %cst_20 = arith.constant dense<0.000000e+00> : vector<2x16x256xf32>
    %57 = tpu.matmul %56, %55, %cst_20 {dimension_numbers = #tpu.dot_dimension_numbers<[2], [1], [1], [2], [0, 0, 0, 1, 1, 2], [0], [0]>} : vector<2x16x8xbf16>, vector<2x8x256xbf16>, vector<2x16x256xf32> -> vector<2x16x256xf32>
    "tpu.trace_stop"() : () -> ()
    %58 = vector.extract_strided_slice %57 {offsets = [0, 0, 0], sizes = [2, 16, 128], strides = [1, 1, 1]} : vector<2x16x256xf32> to vector<2x16x128xf32>
    %59 = vector.extract_strided_slice %57 {offsets = [0, 0, 128], sizes = [2, 16, 128], strides = [1, 1, 1]} : vector<2x16x256xf32> to vector<2x16x128xf32>
    %c0_21 = arith.constant 0 : index
    %c0_22 = arith.constant 0 : index
    %c0_23 = arith.constant 0 : index
    %60 = vector.load %arg6[%c0_21, %c0_22, %c0_23] : memref<2x16x512xbf16, #tpu.memory_space<vmem>>, vector<2x16x128xbf16>
    tpu.vector_store %arg6[%c0_21, %c0_22, %c0_23], %0 {strides = array<i32>} : memref<2x16x512xbf16, #tpu.memory_space<vmem>>, vector<2x16x128xbf16>,
    %61 = arith.truncf %58 : vector<2x16x128xf32> to vector<2x16x128xbf16>
    %c0_24 = arith.constant 0 : index
    %c0_25 = arith.constant 0 : index
    %c128 = arith.constant 128 : index
    %62 = vector.load %arg6[%c0_24, %c0_25, %c128] : memref<2x16x512xbf16, #tpu.memory_space<vmem>>, vector<2x16x128xbf16>
    tpu.vector_store %arg6[%c0_24, %c0_25, %c128], %61 {strides = array<i32>} : memref<2x16x512xbf16, #tpu.memory_space<vmem>>, vector<2x16x128xbf16>,
    %63 = arith.mulf %2, %58 : vector<2x16x128xf32>
    %64 = arith.truncf %63 : vector<2x16x128xf32> to vector<2x16x128xbf16>
    %c0_26 = arith.constant 0 : index
    %c0_27 = arith.constant 0 : index
    %c256 = arith.constant 256 : index
    %65 = vector.load %arg6[%c0_26, %c0_27, %c256] : memref<2x16x512xbf16, #tpu.memory_space<vmem>>, vector<2x16x128xbf16>
    tpu.vector_store %arg6[%c0_26, %c0_27, %c256], %64 {strides = array<i32>} : memref<2x16x512xbf16, #tpu.memory_space<vmem>>, vector<2x16x128xbf16>,
    %66 = arith.mulf %2, %59 : vector<2x16x128xf32>
    %67 = arith.truncf %66 : vector<2x16x128xf32> to vector<2x16x128xbf16>
    %c0_28 = arith.constant 0 : index
    %c0_29 = arith.constant 0 : index
    %c384 = arith.constant 384 : index
    %68 = vector.load %arg6[%c0_28, %c0_29, %c384] : memref<2x16x512xbf16, #tpu.memory_space<vmem>>, vector<2x16x128xbf16>
    tpu.vector_store %arg6[%c0_28, %c0_29, %c384], %67 {strides = array<i32>} : memref<2x16x512xbf16, #tpu.memory_space<vmem>>, vector<2x16x128xbf16>,
    return
  }
  func.func @transform_0(%arg0: i32) -> (i32, i32, i32) {
    %c0_i32 = arith.constant 0 : i32
    %c0_i32_0 = arith.constant 0 : i32
    %c0_i32_1 = arith.constant 0 : i32
    return %arg0, %c0_i32, %c0_i32_0 : i32, i32, i32
  }
  func.func @transform_1(%arg0: i32) -> (i32, i32, i32) {
    %c0_i32 = arith.constant 0 : i32
    %c0_i32_0 = arith.constant 0 : i32
    %c0_i32_1 = arith.constant 0 : i32
    return %arg0, %c0_i32, %c0_i32_0 : i32, i32, i32
  }
  func.func @transform_2(%arg0: i32) -> (i32, i32, i32) {
    %c0_i32 = arith.constant 0 : i32
    %c0_i32_0 = arith.constant 0 : i32
    %c0_i32_1 = arith.constant 0 : i32
    return %arg0, %c0_i32, %c0_i32_0 : i32, i32, i32
  }
  func.func @transform_3(%arg0: i32) -> (i32, i32, i32) {
    %c0_i32 = arith.constant 0 : i32
    %c0_i32_0 = arith.constant 0 : i32
    %c0_i32_1 = arith.constant 0 : i32
    return %arg0, %c0_i32, %c0_i32_0 : i32, i32, i32
  }
  func.func @transform_4(%arg0: i32) -> (i32, i32) {
    %c0_i32 = arith.constant 0 : i32
    %c0_i32_0 = arith.constant 0 : i32
    %c0_i32_1 = arith.constant 0 : i32
    return %c0_i32, %c0_i32_0 : i32, i32
  }
  func.func @transform_5(%arg0: i32) -> (i32, i32, i32) {
    %c0_i32 = arith.constant 0 : i32
    %c0_i32_0 = arith.constant 0 : i32
    %c0_i32_1 = arith.constant 0 : i32
    return %arg0, %c0_i32, %c0_i32_0 : i32, i32, i32
  }
}

</mosaic_0001>

<llo_original>
// kernel: tpu_custom_call.1
$region0: #{tpu_custom_call.1}
  #allocation0 [shape = 'u32[]', space=smem, size = 0x4, offset = 0x4, fixed_abs, tag = 'smem constant byte address 0x4 - core index']
  #allocation1 [shape = 'u32[144,128]{1,0:T(1,128)}', space=vmem, size = 0x12000, scoped, tag = 'internal scratch']
  %s0 = inlined_call_operand.vmem [shape: bf16[4,16,128], index: 0, kind: input, shape index: {}]
  %s1 = inlined_call_operand.vmem [shape: bf16[4,8,128], index: 1, kind: input, shape index: {}]
  %s2 = inlined_call_operand.vmem [shape: f32[4,16,1], index: 2, kind: input, shape index: {}]
  %s3 = inlined_call_operand.vmem [shape: f32[4,1,8], index: 3, kind: input, shape index: {}]
  %s4 = inlined_call_operand.vmem [shape: f32[3,128], index: 4, kind: input, shape index: {}]
  %s5 = inlined_call_operand.hbm [shape: bf16[4,16,512], index: 5, kind: output, shape index: {}]
  %s6 = sld [smem:[#allocation0]]
  $region53: #{tpu_custom_call.1} parent=0
    _
  %s8 = ssub.s32 1, %s6
  %s9 = scalar_select 0, %s8, %s6
  $region1: #{tpu_custom_call.1} parent=0
    #allocation2 [shape = 'u8[65536]{0}', space=vmem, size = 0x10000, scoped, tag = 'output window, operand 0']
    #allocation3 [shape = 's32[2]{0}', space=sflag, size = 0x8, scoped, tag = 'scoped memory for tpu_custom_call.1']
    %10 = vsyncpa [#allocation3], 0
    %s11 = scalar_lea.sflag [#allocation3], 1
    %12 = vsyncpa %s11, 0
    loop: start=0, step=1, limit=4
    $region2: #{tpu_custom_call.1} parent=1 // loop_pre_header
      _
    $region3: #{tpu_custom_call.1} parent=1 // loop_header
      %s14 = sphi 0, %s18
      %p15 = scmp.ge.s32.totalorder %s14, 4
      %s24 = sphi 0, %s26
      %s27 = sphi 0, %s24
      %s28 = sphi 0, %s27
      %s44 = sphi 0, %s28
      %s50 = sphi 0, %s52
      %s53 = sphi 0, %s50
      %s54 = sphi 0, %s53
      %s70 = sphi 0, %s54
      %s76 = sphi 0, %s78
      %s79 = sphi 0, %s76
      %s80 = sphi 0, %s79
      %s96 = sphi 0, %s80
      %s102 = sphi 0, %s104
      %s105 = sphi 0, %s102
      %s106 = sphi 0, %s105
      %s122 = sphi 0, %s106
      %s126 = sphi 0, %s126
      %s128 = sphi 0, %s126
      %s129 = sphi 0, %s128
      %s143 = sphi 0, %s129
      %s149 = sphi 0, %s151
      %s152 = sphi 0, %s149
      %s153 = sphi 0, %s152
      %s169 = sphi 0, %s153
    $region4: #{tpu_custom_call.1} parent=1 // loop_header_branch
      %17 = sbr.rel (%p15) target = $region8
    $region5: #{tpu_custom_call.1} parent=1 // loop_body
      %s19 = ssub.s32 %s14, 1
      %s20 = ssub.s32 %s14, 2
      %s21 = sadd.s32 %s14, 1
      %s22 = ssub.s32 %s14, %s21
      %p23 = scmp.eq.s32.totalorder %s22, 0
      %s25 = sadd.s32 %s24, 1
      %s26 = scalar_select %p23, %s24, %s25
      %p29 = pneg %p23
      %p30 = scmp.eq.s32.totalorder %s14, 1
      %p31 = por %p29, %p30
      %p32 = scmp.ne.s32.totalorder %s24, %s27
      %p33 = scmp.eq.s32.totalorder %s14, 0
      %p34 = por %p32, %p33
      %p35 = scmp.ne.s32.totalorder %s24, %s27
      %p36 = scmp.eq.s32.totalorder %s19, 1
      %p37 = por %p35, %p36
      %p38 = scmp.ne.s32.totalorder %s27, %s28
      %p39 = scmp.eq.s32.totalorder %s19, 0
      %p40 = por %p38, %p39
      %p41 = scmp.ne.s32.totalorder %s27, %s28
      %p42 = scmp.eq.s32.totalorder %s20, 1
      %p43 = por %p41, %p42
      %p45 = scmp.ne.s32.totalorder %s28, %s44
      %p46 = scmp.eq.s32.totalorder %s20, 0
      %p47 = por %p45, %p46
      %s48 = ssub.s32 %s14, %s21
      %p49 = scmp.eq.s32.totalorder %s48, 0
      %s51 = sadd.s32 %s50, 1
      %s52 = scalar_select %p49, %s50, %s51
      %p55 = pneg %p49
      %p56 = scmp.eq.s32.totalorder %s14, 1
      %p57 = por %p55, %p56
      %p58 = scmp.ne.s32.totalorder %s50, %s53
      %p59 = scmp.eq.s32.totalorder %s14, 0
      %p60 = por %p58, %p59
      %p61 = scmp.ne.s32.totalorder %s50, %s53
      %p62 = scmp.eq.s32.totalorder %s19, 1
      %p63 = por %p61, %p62
      %p64 = scmp.ne.s32.totalorder %s53, %s54
      %p65 = scmp.eq.s32.totalorder %s19, 0
      %p66 = por %p64, %p65
      %p67 = scmp.ne.s32.totalorder %s53, %s54
      %p68 = scmp.eq.s32.totalorder %s20, 1
      %p69 = por %p67, %p68
      %p71 = scmp.ne.s32.totalorder %s54, %s70
      %p72 = scmp.eq.s32.totalorder %s20, 0
      %p73 = por %p71, %p72
      %s74 = ssub.s32 %s14, %s21
      %p75 = scmp.eq.s32.totalorder %s74, 0
      %s77 = sadd.s32 %s76, 1
      %s78 = scalar_select %p75, %s76, %s77
      %p81 = pneg %p75
      %p82 = scmp.eq.s32.totalorder %s14, 1
      %p83 = por %p81, %p82
      %p84 = scmp.ne.s32.totalorder %s76, %s79
      %p85 = scmp.eq.s32.totalorder %s14, 0
      %p86 = por %p84, %p85
      %p87 = scmp.ne.s32.totalorder %s76, %s79
      %p88 = scmp.eq.s32.totalorder %s19, 1
      %p89 = por %p87, %p88
      %p90 = scmp.ne.s32.totalorder %s79, %s80
      %p91 = scmp.eq.s32.totalorder %s19, 0
      %p92 = por %p90, %p91
      %p93 = scmp.ne.s32.totalorder %s79, %s80
      %p94 = scmp.eq.s32.totalorder %s20, 1
      %p95 = por %p93, %p94
      %p97 = scmp.ne.s32.totalorder %s80, %s96
      %p98 = scmp.eq.s32.totalorder %s20, 0
      %p99 = por %p97, %p98
      %s100 = ssub.s32 %s14, %s21
      %p101 = scmp.eq.s32.totalorder %s100, 0
      %s103 = sadd.s32 %s102, 1
      %s104 = scalar_select %p101, %s102, %s103
      %p107 = pneg %p101
      %p108 = scmp.eq.s32.totalorder %s14, 1
      %p109 = por %p107, %p108
      %p110 = scmp.ne.s32.totalorder %s102, %s105
      %p111 = scmp.eq.s32.totalorder %s14, 0
      %p112 = por %p110, %p111
      %p113 = scmp.ne.s32.totalorder %s102, %s105
      %p114 = scmp.eq.s32.totalorder %s19, 1
      %p115 = por %p113, %p114
      %p116 = scmp.ne.s32.totalorder %s105, %s106
      %p117 = scmp.eq.s32.totalorder %s19, 0
      %p118 = por %p116, %p117
      %p119 = scmp.ne.s32.totalorder %s105, %s106
      %p120 = scmp.eq.s32.totalorder %s20, 1
      %p121 = por %p119, %p120
      %p123 = scmp.ne.s32.totalorder %s106, %s122
      %p124 = scmp.eq.s32.totalorder %s20, 0
      %p125 = por %p123, %p124
      %s127 = sadd.s32 %s126, 1
      %p130 = scmp.eq.s32.totalorder %s14, 1
      %p131 = scmp.ne.s32.totalorder %s126, %s128
      %p132 = scmp.eq.s32.totalorder %s14, 0
      %p133 = por %p131, %p132
      %p134 = scmp.ne.s32.totalorder %s126, %s128
      %p135 = scmp.eq.s32.totalorder %s19, 1
      %p136 = por %p134, %p135
      %p137 = scmp.ne.s32.totalorder %s128, %s129
      %p138 = scmp.eq.s32.totalorder %s19, 0
      %p139 = por %p137, %p138
      %p140 = scmp.ne.s32.totalorder %s128, %s129
      %p141 = scmp.eq.s32.totalorder %s20, 1
      %p142 = por %p140, %p141
      %p144 = scmp.ne.s32.totalorder %s129, %s143
      %p145 = scmp.eq.s32.totalorder %s20, 0
      %p146 = por %p144, %p145
      %s147 = ssub.s32 %s14, %s21
      %p148 = scmp.eq.s32.totalorder %s147, 0
      %s150 = sadd.s32 %s149, 1
      %s151 = scalar_select %p148, %s149, %s150
      %p154 = pneg %p148
      %p155 = scmp.eq.s32.totalorder %s14, 1
      %p156 = por %p154, %p155
      %p157 = scmp.ne.s32.totalorder %s149, %s152
      %p158 = scmp.eq.s32.totalorder %s14, 0
      %p159 = por %p157, %p158
      %p160 = scmp.ne.s32.totalorder %s149, %s152
      %p161 = scmp.eq.s32.totalorder %s19, 1
      %p162 = por %p160, %p161
      %p163 = scmp.ne.s32.totalorder %s152, %s153
      %p164 = scmp.eq.s32.totalorder %s19, 0
      %p165 = por %p163, %p164
      %p166 = scmp.ne.s32.totalorder %s152, %s153
      %p167 = scmp.eq.s32.totalorder %s20, 1
      %p168 = por %p166, %p167
      %p170 = scmp.ne.s32.totalorder %s153, %s169
      %p171 = scmp.eq.s32.totalorder %s20, 0
      %p172 = por %p170, %p171
      %p173 = scmp.le.s32.totalorder 1, %s14
      %p174 = scmp.lt.s32.totalorder %s14, 3
      %p175 = pnand %p173, %p174
      %p176 = pneg %p175
      // Predicated region
      $region9: #{tpu_custom_call.1} parent=5 // pred_check
        _
      $region10: #{tpu_custom_call.1} parent=5 // pred_check_branch
        %178 = sbr.rel (%p175) target = $region12
      $region11: #{tpu_custom_call.1} parent=5 // pred_region
        %s179 = ssub.s32 %s14, 1
        // Predicated region
        $region13: #{tpu_custom_call.1} parent=11 // pred_check
          %p180 = pneg %p139
        $region14: #{tpu_custom_call.1} parent=11 // pred_check_branch
          %182 = sbr.rel (%p180) target = $region16
        $region15: #{tpu_custom_call.1} parent=11 // pred_region
          _
        $region16: #{tpu_custom_call.1} parent=11 // pred_fallthru
          _
      $region12: #{tpu_custom_call.1} parent=5 // pred_fallthru
        _
      %p183 = scmp.lt.s32.totalorder %s14, 2
      // Predicated region
      $region17: #{tpu_custom_call.1} parent=5 // pred_check
        %p184 = pneg %p183
      $region18: #{tpu_custom_call.1} parent=5 // pred_check_branch
        %186 = sbr.rel (%p184) target = $region20
      $region19: #{tpu_custom_call.1} parent=5 // pred_region
        // Predicated region
        $region21: #{tpu_custom_call.1} parent=19 // pred_check
          %p187 = pneg %p34
        $region22: #{tpu_custom_call.1} parent=19 // pred_check_branch
          %189 = sbr.rel (%p187) target = $region24
        $region23: #{tpu_custom_call.1} parent=19 // pred_region
          %s190 = smul.u32 2, %s14
          %p191 = scmp.lt.s32.totalorder %s190, 3
          %s192 = scalar_select %p191, %s190, 3
          %s193 = smul.addr %s192, 2
          %s194 = smul.addr %s193, 4
          %s195 = scalar_lea.vmem %s0, %s194
          %s196 = smul.u32 2, %s14
        $region24: #{tpu_custom_call.1} parent=19 // pred_fallthru
          _
        // Predicated region
        $region25: #{tpu_custom_call.1} parent=19 // pred_check
          %p197 = pneg %p60
        $region26: #{tpu_custom_call.1} parent=19 // pred_check_branch
          %199 = sbr.rel (%p197) target = $region28
        $region27: #{tpu_custom_call.1} parent=19 // pred_region
          %s200 = smul.u32 2, %s14
          %p201 = scmp.lt.s32.totalorder %s200, 3
          %s202 = scalar_select %p201, %s200, 3
          %s203 = smul.addr %s202, 4
          %s204 = scalar_lea.vmem %s1, %s203
          %s205 = smul.u32 2, %s14
        $region28: #{tpu_custom_call.1} parent=19 // pred_fallthru
          _
        // Predicated region
        $region29: #{tpu_custom_call.1} parent=19 // pred_check
          %p206 = pneg %p86
        $region30: #{tpu_custom_call.1} parent=19 // pred_check_branch
          %208 = sbr.rel (%p206) target = $region32
        $region31: #{tpu_custom_call.1} parent=19 // pred_region
          %s209 = smul.u32 2, %s14
          %p210 = scmp.lt.s32.totalorder %s209, 3
          %s211 = scalar_select %p210, %s209, 3
          %s212 = smul.addr %s211, 2
          %s213 = smul.addr %s212, 8
          %s214 = scalar_lea.vmem %s2, %s213
          %s215 = smul.u32 2, %s14
        $region32: #{tpu_custom_call.1} parent=19 // pred_fallthru
          _
        // Predicated region
        $region33: #{tpu_custom_call.1} parent=19 // pred_check
          %p216 = pneg %p112
        $region34: #{tpu_custom_call.1} parent=19 // pred_check_branch
          %218 = sbr.rel (%p216) target = $region36
        $region35: #{tpu_custom_call.1} parent=19 // pred_region
          %s219 = smul.u32 2, %s14
          %p220 = scmp.lt.s32.totalorder %s219, 3
          %s221 = scalar_select %p220, %s219, 3
          %s222 = scalar_lea.vmem %s3, %s221
          %s223 = smul.u32 2, %s14
        $region36: #{tpu_custom_call.1} parent=19 // pred_fallthru
          _
      $region20: #{tpu_custom_call.1} parent=5 // pred_fallthru
        _
      %p224 = scmp.le.s32.totalorder 1, %s14
      %p225 = scmp.lt.s32.totalorder %s14, 3
      %p226 = pnand %p224, %p225
      %p227 = pneg %p226
      // Predicated region
      $region37: #{tpu_custom_call.1} parent=5 // pred_check
        _
      $region38: #{tpu_custom_call.1} parent=5 // pred_check_branch
        %229 = sbr.rel (%p226) target = $region40
      $region39: #{tpu_custom_call.1} parent=5 // pred_region
        %s230 = ssub.s32 %s14, 1
        %s231 = smul.u32 2, %s19
        %p232 = scmp.lt.s32.totalorder %s231, 3
        %s233 = scalar_select %p232, %s231, 3
        %s234 = smul.addr %s233, 2
        %s235 = smul.addr %s234, 4
        %s236 = scalar_lea.vmem %s0, %s235
        %p237 = pneg %p40
        %p238 = pneg %p37
        %s239 = smul.u32 2, %s19
        %p240 = scmp.lt.s32.totalorder %s239, 3
        %s241 = scalar_select %p240, %s239, 3
        %s242 = smul.addr %s241, 4
        %s243 = scalar_lea.vmem %s1, %s242
        %p244 = pneg %p66
        %p245 = pneg %p63
        %s246 = smul.u32 2, %s19
        %p247 = scmp.lt.s32.totalorder %s246, 3
        %s248 = scalar_select %p247, %s246, 3
        %s249 = smul.addr %s248, 2
        %s250 = smul.addr %s249, 8
        %s251 = scalar_lea.vmem %s2, %s250
        %p252 = pneg %p92
        %p253 = pneg %p89
        %s254 = smul.u32 2, %s19
        %p255 = scmp.lt.s32.totalorder %s254, 3
        %s256 = scalar_select %p255, %s254, 3
        %s257 = scalar_lea.vmem %s3, %s256
        %p258 = pneg %p118
        %p259 = pneg %p115
        %p260 = pneg %p139
        %p261 = pneg %p136
        %p262 = pneg %p165
        %p263 = pneg %p162
        %s264 = sand.u32 %s152, 1
        %s265 = scalar_lea.sflag [#allocation3], %s264
        %s266 = sand.u32 %s152, 1
        %s267 = smul.addr %s266, 64
        %s268 = scalar_lea.vmem [#allocation2], %s267
        %s269 = smul.u32 2, %s19
        %p270 = scmp.lt.s32.totalorder %s269, 3
        %s271 = scalar_select %p270, %s269, 3
        %s272 = smul.addr %s271, 2
        %s273 = smul.addr %s272, 4
        %s274 = scalar_lea.vmem %s0, %s273
        %s275 = smul.u32 2, %s19
        %s276 = smul.u32 2, %s19
        %p277 = scmp.lt.s32.totalorder %s276, 3
        %s278 = scalar_select %p277, %s276, 3
        %s279 = smul.addr %s278, 4
        %s280 = scalar_lea.vmem %s1, %s279
        %s281 = smul.u32 2, %s19
        %s282 = smul.u32 2, %s19
        %p283 = scmp.lt.s32.totalorder %s282, 3
        %s284 = scalar_select %p283, %s282, 3
        %s285 = smul.addr %s284, 2
        %s286 = smul.addr %s285, 8
        %s287 = scalar_lea.vmem %s2, %s286
        %s288 = smul.u32 2, %s19
        %s289 = smul.u32 2, %s19
        %p290 = scmp.lt.s32.totalorder %s289, 3
        %s291 = scalar_select %p290, %s289, 3
        %s292 = scalar_lea.vmem %s3, %s291
        %s293 = smul.u32 2, %s19
        %s294 = smul.u32 2, %s19
        %v296 = vld [vmem:[%s274] sm:$0xf]
        %v297 = vld [vmem:[%s274 + $0x4] sm:$0xf]
        %v298 = vld [vmem:[%s274 + $0x8] sm:$0xf]
        %v299 = vld [vmem:[%s274 + $0xc] sm:$0xf]
        %v300 = vld [vmem:[%s280] sm:$0xf]
        %v301 = vld [vmem:[%s280 + $0x4] sm:$0xf]
        %v302 = vunpack.c.l.bf16 %v296
        %v303 = vunpack.c.l.bf16 %v297
        %v304 = vunpack.c.l.bf16 %v298
        %v305 = vunpack.c.l.bf16 %v299
        %v306 = vunpack.c.l.bf16 %v300
        %v307 = vunpack.c.l.bf16 %v301
        %v308 = vld [vmem:[%s287] sm:$0xff]
        %v309 = vld [vmem:[%s287 + $0x8] sm:$0xff]
        %v310 = vld [vmem:[%s287 + $0x10] sm:$0xff]
        %v311 = vld [vmem:[%s287 + $0x18] sm:$0xff]
        %v312 = vld [vmem:[%s292] sm:$0x1]
        %v313 = vld [vmem:[%s292 + $0x1] sm:$0x1]
        %v314 = vld [vmem:[%s4] sm:$0x7]
        %v315 = vlaneseq
        %v316 = vshrl.u32 %v315, 7
        %v317 = vsub.s32 0, %v316
        %v318 = vrot.slane %v314, %v317
        %v319 = vmul.f32 %v302, %v318
        %v320 = vmul.f32 %v303, %v318
        %v321 = vmul.f32 %v304, %v318
        %v322 = vmul.f32 %v305, %v318
        %323 = vadd.xlane.f32.xlu0 %v319
        %v324 = vpop.xlane.xlu0 %323
        %325 = vadd.xlane.f32.xlu0 %v320
        %v326 = vpop.xlane.xlu0 %325
        %327 = vadd.xlane.f32.xlu0 %v321
        %v328 = vpop.xlane.xlu0 %327
        %329 = vadd.xlane.f32.xlu0 %v322
        %v330 = vpop.xlane.xlu0 %329
        %v331 = vlaneseq
        %v332 = vshrl.u32 %v331, 7
        %v333 = vsub.s32 1, %v332
        %v334 = vrot.slane %v314, %v333
        %v335 = vmul.f32 %v306, %v334
        %v336 = vmul.f32 %v307, %v334
        %337 = vadd.xlane.f32.xlu0 %v335
        %v338 = vpop.xlane.xlu0 %337
        %339 = vadd.xlane.f32.xlu0 %v336
        %v340 = vpop.xlane.xlu0 %339
        %341 = vxpose.xlu0.b32.start [1/16] %v338, 128
        %342 = vxpose.xlu0.b32.cont [2/16] 0.0, 128
        %343 = vxpose.xlu0.b32.cont [3/16] 0.0, 128
        %344 = vxpose.xlu0.b32.cont [4/16] 0.0, 128
        %345 = vxpose.xlu0.b32.cont [5/16] 0.0, 128
        %346 = vxpose.xlu0.b32.cont [6/16] 0.0, 128
        %347 = vxpose.xlu0.b32.cont [7/16] 0.0, 128
        %348 = vxpose.xlu0.b32.cont [8/16] 0.0, 128
        %349 = vxpose.xlu0.b32.cont [9/16] 0.0, 128
        %350 = vxpose.xlu0.b32.cont [10/16] 0.0, 128
        %351 = vxpose.xlu0.b32.cont [11/16] 0.0, 128
        %352 = vxpose.xlu0.b32.cont [12/16] 0.0, 128
        %353 = vxpose.xlu0.b32.cont [13/16] 0.0, 128
        %354 = vxpose.xlu0.b32.cont [14/16] 0.0, 128
        %355 = vxpose.xlu0.b32.cont [15/16] 0.0, 128
        %356 = vxpose.xlu0.b32.end [16/16] 0.0, 128
        %v357 = vpop.trf.xlu0
        %v358 = vpop.trf.xlu0
        %v359 = vpop.trf.xlu0
        %v360 = vpop.trf.xlu0
        %v361 = vpop.trf.xlu0
        %v362 = vpop.trf.xlu0
        %v363 = vpop.trf.xlu0
        %v364 = vpop.trf.xlu0
        %v365 = vpop.trf.xlu0
        %v366 = vpop.trf.xlu0
        %v367 = vpop.trf.xlu0
        %v368 = vpop.trf.xlu0
        %v369 = vpop.trf.xlu0
        %v370 = vpop.trf.xlu0
        %v371 = vpop.trf.xlu0
        %v372 = vpop.trf.xlu0
        %373 = vxpose.xlu0.b32.start [1/16] %v340, 128
        %374 = vxpose.xlu0.b32.cont [2/16] 0.0, 128
        %375 = vxpose.xlu0.b32.cont [3/16] 0.0, 128
        %376 = vxpose.xlu0.b32.cont [4/16] 0.0, 128
        %377 = vxpose.xlu0.b32.cont [5/16] 0.0, 128
        %378 = vxpose.xlu0.b32.cont [6/16] 0.0, 128
        %379 = vxpose.xlu0.b32.cont [7/16] 0.0, 128
        %380 = vxpose.xlu0.b32.cont [8/16] 0.0, 128
        %381 = vxpose.xlu0.b32.cont [9/16] 0.0, 128
        %382 = vxpose.xlu0.b32.cont [10/16] 0.0, 128
        %383 = vxpose.xlu0.b32.cont [11/16] 0.0, 128
        %384 = vxpose.xlu0.b32.cont [12/16] 0.0, 128
        %385 = vxpose.xlu0.b32.cont [13/16] 0.0, 128
        %386 = vxpose.xlu0.b32.cont [14/16] 0.0, 128
        %387 = vxpose.xlu0.b32.cont [15/16] 0.0, 128
        %388 = vxpose.xlu0.b32.end [16/16] 0.0, 128
        %v389 = vpop.trf.xlu0
        %v390 = vpop.trf.xlu0
        %v391 = vpop.trf.xlu0
        %v392 = vpop.trf.xlu0
        %v393 = vpop.trf.xlu0
        %v394 = vpop.trf.xlu0
        %v395 = vpop.trf.xlu0
        %v396 = vpop.trf.xlu0
        %v397 = vpop.trf.xlu0
        %v398 = vpop.trf.xlu0
        %v399 = vpop.trf.xlu0
        %v400 = vpop.trf.xlu0
        %v401 = vpop.trf.xlu0
        %v402 = vpop.trf.xlu0
        %v403 = vpop.trf.xlu0
        %v404 = vpop.trf.xlu0
        %v405 = vlaneseq
        %v406 = vshrl.u32 %v405, 7
        %v407 = vsub.s32 2, %v406
        %v408 = vrot.slane %v314, %v407
        %v409 = vmul.f32 %v302, %v408
        %v410 = vmul.f32 %v303, %v408
        %v411 = vmul.f32 %v304, %v408
        %v412 = vmul.f32 %v305, %v408
        %v413 = vpack.c.bf16 %v410, %v409
        %v414 = vpack.c.bf16 %v412, %v411
        %415 = vmatprep.subr.bf16.mxu0 0
        %416 = vmatpush1.bf16.xpose.msra.mxu0 %v300
        %417 = vmatprep.subr.bf16.mxu0 0
        %418 = vmatpush1.bf16.xpose.msra.mxu0 0
        %419 = vmatprep.subr.bf16.mxu0 0
        %420 = vmatpush1.bf16.xpose.msra.mxu0 0
        %421 = vmatprep.subr.bf16.mxu0 0
        %422 = vmatpush1.bf16.xpose.msra.mxu0 0
        %423 = vmatprep.subr.bf16.mxu0 0
        %424 = vmatpush1.bf16.xpose.msra.mxu0 0
        %425 = vmatprep.subr.bf16.mxu0 0
        %426 = vmatpush1.bf16.xpose.msra.mxu0 0
        %427 = vmatprep.subr.bf16.mxu0 0
        %428 = vmatpush1.bf16.xpose.msra.mxu0 0
        %429 = vmatprep.subr.bf16.mxu0 0
        %430 = vmatpush1.bf16.xpose.msra.mxu0 0
        %431 = vmatprep.subr.bf16.mxu0 0
        %432 = vmatpush1.bf16.xpose.msra.mxu0 0
        %433 = vmatprep.subr.bf16.mxu0 0
        %434 = vmatpush1.bf16.xpose.msra.mxu0 0
        %435 = vmatprep.subr.bf16.mxu0 0
        %436 = vmatpush1.bf16.xpose.msra.mxu0 0
        %437 = vmatprep.subr.bf16.mxu0 0
        %438 = vmatpush1.bf16.xpose.msra.mxu0 0
        %439 = vmatprep.subr.bf16.mxu0 0
        %440 = vmatpush1.bf16.xpose.msra.mxu0 0
        %441 = vmatprep.subr.bf16.mxu0 0
        %442 = vmatpush1.bf16.xpose.msra.mxu0 0
        %443 = vmatprep.subr.bf16.mxu0 0
        %444 = vmatpush1.bf16.xpose.msra.mxu0 0
        %445 = vmatprep.subr.bf16.mxu0 0
        %446 = vmatpush1.bf16.xpose.msra.mxu0 0
        %447 = vmatprep.mubr.bf16.mxu0 0
        %448 = vmatmul.mubr.bf16.gmra.mrb[0].mxu0 %v413
        %v449 = vpop.f32.mrb[0].mxu0
        %v450 = vadd.f32 %v324, %v449
        %v451 = vpop.f32.mrb[0].mxu0
        %v452 = vpop.f32.mrb[0].mxu0
        %v453 = vadd.f32 %v326, %v452
        %v454 = vpop.f32.mrb[0].mxu0
        %455 = vdwg.mxu0
        %456 = vmatprep.subr.bf16.mxu0 0
        %457 = vmatpush1.bf16.xpose.msra.mxu0 %v301
        %458 = vmatprep.subr.bf16.mxu0 0
        %459 = vmatpush1.bf16.xpose.msra.mxu0 0
        %460 = vmatprep.subr.bf16.mxu0 0
        %461 = vmatpush1.bf16.xpose.msra.mxu0 0
        %462 = vmatprep.subr.bf16.mxu0 0
        %463 = vmatpush1.bf16.xpose.msra.mxu0 0
        %464 = vmatprep.subr.bf16.mxu0 0
        %465 = vmatpush1.bf16.xpose.msra.mxu0 0
        %466 = vmatprep.subr.bf16.mxu0 0
        %467 = vmatpush1.bf16.xpose.msra.mxu0 0
        %468 = vmatprep.subr.bf16.mxu0 0
        %469 = vmatpush1.bf16.xpose.msra.mxu0 0
        %470 = vmatprep.subr.bf16.mxu0 0
        %471 = vmatpush1.bf16.xpose.msra.mxu0 0
        %472 = vmatprep.subr.bf16.mxu0 0
        %473 = vmatpush1.bf16.xpose.msra.mxu0 0
        %474 = vmatprep.subr.bf16.mxu0 0
        %475 = vmatpush1.bf16.xpose.msra.mxu0 0
        %476 = vmatprep.subr.bf16.mxu0 0
        %477 = vmatpush1.bf16.xpose.msra.mxu0 0
        %478 = vmatprep.subr.bf16.mxu0 0
        %479 = vmatpush1.bf16.xpose.msra.mxu0 0
        %480 = vmatprep.subr.bf16.mxu0 0
        %481 = vmatpush1.bf16.xpose.msra.mxu0 0
        %482 = vmatprep.subr.bf16.mxu0 0
        %483 = vmatpush1.bf16.xpose.msra.mxu0 0
        %484 = vmatprep.subr.bf16.mxu0 0
        %485 = vmatpush1.bf16.xpose.msra.mxu0 0
        %486 = vmatprep.subr.bf16.mxu0 0
        %487 = vmatpush1.bf16.xpose.msra.mxu0 0
        %488 = vmatprep.mubr.bf16.mxu0 0
        %489 = vmatmul.mubr.bf16.gmra.mrb[0].mxu0 %v414
        %v490 = vpop.f32.mrb[0].mxu0
        %v491 = vadd.f32 %v328, %v490
        %v492 = vpop.f32.mrb[0].mxu0
        %v493 = vpop.f32.mrb[0].mxu0
        %v494 = vadd.f32 %v330, %v493
        %v495 = vpop.f32.mrb[0].mxu0
        %496 = vdwg.mxu0
        %v497 = vlaneseq
        %v498 = vshrl.u32 %v497, 7
        %v499 = vsub.s32 0, %v498
        %v500 = vrot.slane %v357, %v499
        %v501 = vlaneseq
        %v502 = vshrl.u32 %v501, 7
        %v503 = vsub.s32 0, %v502
        %v504 = vrot.slane %v389, %v503
        %v505 = vadd.f32 %v450, %v500
        %v506 = vadd.f32 %v453, %v500
        %v507 = vadd.f32 %v491, %v504
        %v508 = vadd.f32 %v494, %v504
        %v511 = vlaneseq
        %v512 = vshrl.u32 %v511, 7
        %v513 = vsub.s32 0, %v512
        %v514 = vrot.slane %v312, %v513
        %v515 = vlaneseq
        %v516 = vshrl.u32 %v515, 7
        %v517 = vsub.s32 0, %v516
        %v518 = vrot.slane %v313, %v517
        %v521 = vadd.f32 %v505, %v514
        %v522 = vadd.f32 %v506, %v514
        %v523 = vadd.f32 %v507, %v518
        %v524 = vadd.f32 %v508, %v518
        %vm525 = vcmask 64512
        %v526 = vsel %vm525, %v521, -inf
        %527 = vmax.xlane.f32.xlu0 %v526
        %v528 = vpop.xlane.xlu0 %527
        %v529 = vsel %vm525, %v522, -inf
        %530 = vmax.xlane.f32.xlu0 %v529
        %v531 = vpop.xlane.xlu0 %530
        %v532 = vsel %vm525, %v523, -inf
        %533 = vmax.xlane.f32.xlu0 %v532
        %v534 = vpop.xlane.xlu0 %533
        %v535 = vsel %vm525, %v524, -inf
        %536 = vmax.xlane.f32.xlu0 %v535
        %v537 = vpop.xlane.xlu0 %536
        %v538 = vsub.f32 %v521, %v528
        %v539 = vsub.f32 %v522, %v531
        %v540 = vsub.f32 %v523, %v534
        %v541 = vsub.f32 %v524, %v537
        %v542 = vmul.f32 %v538, 1.442695
        %v543 = vpow.pop %v542
        %v544 = vmul.f32 %v539, 1.442695
        %v545 = vpow.pop %v544
        %v546 = vmul.f32 %v540, 1.442695
        %v547 = vpow.pop %v546
        %v548 = vmul.f32 %v541, 1.442695
        %v549 = vpow.pop %v548
        %v550 = vsel %vm525, %v543, 0.0
        %551 = vadd.xlane.f32.xlu0 %v550
        %v552 = vpop.xlane.xlu0 %551
        %v553 = vsel %vm525, %v545, 0.0
        %554 = vadd.xlane.f32.xlu0 %v553
        %v555 = vpop.xlane.xlu0 %554
        %v556 = vsel %vm525, %v547, 0.0
        %557 = vadd.xlane.f32.xlu0 %v556
        %v558 = vpop.xlane.xlu0 %557
        %v559 = vsel %vm525, %v549, 0.0
        %560 = vadd.xlane.f32.xlu0 %v559
        %v561 = vpop.xlane.xlu0 %560
        %v562 = vrcp.pop %v552
        %v563 = vmul.f32 %v543, %v562
        %v564 = vrcp.pop %v555
        %v565 = vmul.f32 %v545, %v564
        %v566 = vrcp.pop %v558
        %v567 = vmul.f32 %v547, %v566
        %v568 = vrcp.pop %v561
        %v569 = vmul.f32 %v549, %v568
        %571 = vset.pattern.permute.xlu0 0
        %572 = vperm.xlu0 %571, %v308
        %v573 = vpop.permute.xlu0 %572
        %576 = vset.pattern.permute.xlu0 0
        %577 = vperm.xlu0 %576, %v309
        %v578 = vpop.permute.xlu0 %577
        %581 = vset.pattern.permute.xlu0 0
        %582 = vperm.xlu0 %581, %v310
        %v583 = vpop.permute.xlu0 %582
        %586 = vset.pattern.permute.xlu0 0
        %587 = vperm.xlu0 %586, %v311
        %v588 = vpop.permute.xlu0 %587
        %v590 = vadd.f32 %v505, %v573
        %v591 = vadd.f32 %v506, %v578
        %v592 = vadd.f32 %v507, %v583
        %v593 = vadd.f32 %v508, %v588
        %v594 = vsel %vm525, %v590, -inf
        %v595 = vsel %vm525, %v591, -inf
        %v596 = vmax.f32 %v594, %v595
        %v597 = vrot.slane %v596, 4
        %v598 = vmax.f32 %v596, %v597
        %v599 = vrot.slane %v598, 2
        %v600 = vmax.f32 %v598, %v599
        %v601 = vrot.slane %v600, 1
        %v602 = vmax.f32 %v600, %v601
        %v603 = vsel %vm525, %v592, -inf
        %v604 = vsel %vm525, %v593, -inf
        %v605 = vmax.f32 %v603, %v604
        %v606 = vrot.slane %v605, 4
        %v607 = vmax.f32 %v605, %v606
        %v608 = vrot.slane %v607, 2
        %v609 = vmax.f32 %v607, %v608
        %v610 = vrot.slane %v609, 1
        %v611 = vmax.f32 %v609, %v610
        %v612 = vsub.f32 %v590, %v602
        %v613 = vsub.f32 %v591, %v602
        %v614 = vsub.f32 %v592, %v611
        %v615 = vsub.f32 %v593, %v611
        %v616 = vmul.f32 %v612, 1.442695
        %v617 = vpow.pop %v616
        %v618 = vmul.f32 %v613, 1.442695
        %v619 = vpow.pop %v618
        %v620 = vmul.f32 %v614, 1.442695
        %v621 = vpow.pop %v620
        %v622 = vmul.f32 %v615, 1.442695
        %v623 = vpow.pop %v622
        %v624 = vsel %vm525, %v617, 0.0
        %v625 = vsel %vm525, %v619, 0.0
        %v626 = vadd.f32 %v624, %v625
        %v627 = vrot.slane %v626, 4
        %v628 = vadd.f32 %v626, %v627
        %v629 = vrot.slane %v628, 2
        %v630 = vadd.f32 %v628, %v629
        %v631 = vrot.slane %v630, 1
        %v632 = vadd.f32 %v630, %v631
        %v633 = vsel %vm525, %v621, 0.0
        %v634 = vsel %vm525, %v623, 0.0
        %v635 = vadd.f32 %v633, %v634
        %v636 = vrot.slane %v635, 4
        %v637 = vadd.f32 %v635, %v636
        %v638 = vrot.slane %v637, 2
        %v639 = vadd.f32 %v637, %v638
        %v640 = vrot.slane %v639, 1
        %v641 = vadd.f32 %v639, %v640
        %v642 = vrcp.pop %v632
        %v643 = vmul.f32 %v617, %v642
        %v644 = vmul.f32 %v619, %v642
        %v645 = vrcp.pop %v641
        %v646 = vmul.f32 %v621, %v645
        %v647 = vmul.f32 %v623, %v645
        %v648 = vpack.c.bf16 %v644, %v643
        %v649 = vpack.c.bf16 %v647, %v646
        %650 = vxpose.xlu0.c.b16.start [1/8] %v648, 128
        %651 = vxpose.xlu0.c.b16.cont [2/8] 0, 128
        %652 = vxpose.xlu0.c.b16.cont [3/8] 0, 128
        %653 = vxpose.xlu0.c.b16.cont [4/8] 0, 128
        %654 = vxpose.xlu0.c.b16.cont [5/8] 0, 128
        %655 = vxpose.xlu0.c.b16.cont [6/8] 0, 128
        %656 = vxpose.xlu0.c.b16.cont [7/8] 0, 128
        %657 = vxpose.xlu0.c.b16.end [8/8] 0, 128
        %v658 = vpop.trf.xlu0
        %v659 = vpop.trf.xlu0
        %v660 = vpop.trf.xlu0
        %v661 = vpop.trf.xlu0
        %v662 = vpop.trf.xlu0
        %v663 = vpop.trf.xlu0
        %v664 = vpop.trf.xlu0
        %v665 = vpop.trf.xlu0
        %v668 = vunpack.c.l.b16 %v296
        %v669 = vunpack.c.l.b16 %v297
        %v670 = vpack.c.b16 %v669, %v668
        %vm672 = vcmask 130048
        %v674 = vsel %vm672, %v658, 0
        %676 = vmatprep.subr.bf16.mxu0 0
        %677 = vmatpush1.bf16.msra.mxu0 %v670
        %678 = vmatprep.subr.bf16.mxu0 0
        %679 = vmatpush1.bf16.msra.mxu0 0
        %680 = vmatprep.subr.bf16.mxu0 0
        %681 = vmatpush1.bf16.msra.mxu0 0
        %682 = vmatprep.subr.bf16.mxu0 0
        %683 = vmatpush1.bf16.msra.mxu0 0
        %684 = vmatprep.subr.bf16.mxu0 0
        %685 = vmatpush1.bf16.msra.mxu0 0
        %686 = vmatprep.subr.bf16.mxu0 0
        %687 = vmatpush1.bf16.msra.mxu0 0
        %688 = vmatprep.subr.bf16.mxu0 0
        %689 = vmatpush1.bf16.msra.mxu0 0
        %690 = vmatprep.subr.bf16.mxu0 0
        %691 = vmatpush1.bf16.msra.mxu0 0
        %692 = vmatprep.subr.bf16.mxu0 0
        %693 = vmatpush1.bf16.msra.mxu0 0
        %694 = vmatprep.subr.bf16.mxu0 0
        %695 = vmatpush1.bf16.msra.mxu0 0
        %696 = vmatprep.subr.bf16.mxu0 0
        %697 = vmatpush1.bf16.msra.mxu0 0
        %698 = vmatprep.subr.bf16.mxu0 0
        %699 = vmatpush1.bf16.msra.mxu0 0
        %700 = vmatprep.subr.bf16.mxu0 0
        %701 = vmatpush1.bf16.msra.mxu0 0
        %702 = vmatprep.subr.bf16.mxu0 0
        %703 = vmatpush1.bf16.msra.mxu0 0
        %704 = vmatprep.subr.bf16.mxu0 0
        %705 = vmatpush1.bf16.msra.mxu0 0
        %706 = vmatprep.subr.bf16.mxu0 0
        %707 = vmatpush1.bf16.msra.mxu0 0
        %708 = vmatprep.mubr.bf16.mxu0 0
        %709 = vmatmul.mubr.bf16.gmra.mrb[0].mxu0 %v674
        %v710 = vpop.f32.mrb[0].mxu0
        %v711 = vadd.f32 0.0, %v710
        %v712 = vpop.f32.mrb[0].mxu0
        %v713 = vpop.f32.mrb[0].mxu0
        %v714 = vpop.f32.mrb[0].mxu0
        %715 = vdwg.mxu0
        %716 = vxpose.xlu0.c.b16.start [1/8] %v649, 128
        %717 = vxpose.xlu0.c.b16.cont [2/8] 0, 128
        %718 = vxpose.xlu0.c.b16.cont [3/8] 0, 128
        %719 = vxpose.xlu0.c.b16.cont [4/8] 0, 128
        %720 = vxpose.xlu0.c.b16.cont [5/8] 0, 128
        %721 = vxpose.xlu0.c.b16.cont [6/8] 0, 128
        %722 = vxpose.xlu0.c.b16.cont [7/8] 0, 128
        %723 = vxpose.xlu0.c.b16.end [8/8] 0, 128
        %v724 = vpop.trf.xlu0
        %v725 = vpop.trf.xlu0
        %v726 = vpop.trf.xlu0
        %v727 = vpop.trf.xlu0
        %v728 = vpop.trf.xlu0
        %v729 = vpop.trf.xlu0
        %v730 = vpop.trf.xlu0
        %v731 = vpop.trf.xlu0
        %v734 = vunpack.c.l.b16 %v298
        %v735 = vunpack.c.l.b16 %v299
        %v736 = vpack.c.b16 %v735, %v734
        %v739 = vsel %vm672, %v724, 0
        %741 = vmatprep.subr.bf16.mxu0 0
        %742 = vmatpush1.bf16.msra.mxu0 %v736
        %743 = vmatprep.subr.bf16.mxu0 0
        %744 = vmatpush1.bf16.msra.mxu0 0
        %745 = vmatprep.subr.bf16.mxu0 0
        %746 = vmatpush1.bf16.msra.mxu0 0
        %747 = vmatprep.subr.bf16.mxu0 0
        %748 = vmatpush1.bf16.msra.mxu0 0
        %749 = vmatprep.subr.bf16.mxu0 0
        %750 = vmatpush1.bf16.msra.mxu0 0
        %751 = vmatprep.subr.bf16.mxu0 0
        %752 = vmatpush1.bf16.msra.mxu0 0
        %753 = vmatprep.subr.bf16.mxu0 0
        %754 = vmatpush1.bf16.msra.mxu0 0
        %755 = vmatprep.subr.bf16.mxu0 0
        %756 = vmatpush1.bf16.msra.mxu0 0
        %757 = vmatprep.subr.bf16.mxu0 0
        %758 = vmatpush1.bf16.msra.mxu0 0
        %759 = vmatprep.subr.bf16.mxu0 0
        %760 = vmatpush1.bf16.msra.mxu0 0
        %761 = vmatprep.subr.bf16.mxu0 0
        %762 = vmatpush1.bf16.msra.mxu0 0
        %763 = vmatprep.subr.bf16.mxu0 0
        %764 = vmatpush1.bf16.msra.mxu0 0
        %765 = vmatprep.subr.bf16.mxu0 0
        %766 = vmatpush1.bf16.msra.mxu0 0
        %767 = vmatprep.subr.bf16.mxu0 0
        %768 = vmatpush1.bf16.msra.mxu0 0
        %769 = vmatprep.subr.bf16.mxu0 0
        %770 = vmatpush1.bf16.msra.mxu0 0
        %771 = vmatprep.subr.bf16.mxu0 0
        %772 = vmatpush1.bf16.msra.mxu0 0
        %773 = vmatprep.mubr.bf16.mxu0 0
        %774 = vmatmul.mubr.bf16.gmra.mrb[0].mxu0 %v739
        %v775 = vpop.f32.mrb[0].mxu0
        %v776 = vadd.f32 0.0, %v775
        %v777 = vpop.f32.mrb[0].mxu0
        %v778 = vpop.f32.mrb[0].mxu0
        %v779 = vpop.f32.mrb[0].mxu0
        %780 = vdwg.mxu0
        %v781 = vpack.c.bf16 %v711, %v711
        %v782 = vpack.c.bf16 %v776, %v776
        %v783 = vpack.c.bf16 %v565, %v563
        %v784 = vpack.c.bf16 %v569, %v567
        %v786 = vsel %vm525, %v783, 0
        %vm788 = vcmask 1043456
        %v790 = vsel %vm788, %v300, 0
        %v793 = vsel %vm788, %v781, 0
        %795 = vmatprep.subr.bf16.mxu0 %v793
        %796 = vmatpush1.bf16.msra.mxu0 %v790
        %797 = vmatprep.subr.bf16.mxu0 0
        %798 = vmatpush1.bf16.msra.mxu0 0
        %799 = vmatprep.subr.bf16.mxu0 0
        %800 = vmatpush1.bf16.msra.mxu0 0
        %801 = vmatprep.subr.bf16.mxu0 0
        %802 = vmatpush1.bf16.msra.mxu0 0
        %803 = vmatprep.subr.bf16.mxu0 0
        %804 = vmatpush1.bf16.msra.mxu0 0
        %805 = vmatprep.subr.bf16.mxu0 0
        %806 = vmatpush1.bf16.msra.mxu0 0
        %807 = vmatprep.subr.bf16.mxu0 0
        %808 = vmatpush1.bf16.msra.mxu0 0
        %809 = vmatprep.subr.bf16.mxu0 0
        %810 = vmatpush1.bf16.msra.mxu0 0
        %811 = vmatprep.subr.bf16.mxu0 0
        %812 = vmatpush1.bf16.msra.mxu0 0
        %813 = vmatprep.subr.bf16.mxu0 0
        %814 = vmatpush1.bf16.msra.mxu0 0
        %815 = vmatprep.subr.bf16.mxu0 0
        %816 = vmatpush1.bf16.msra.mxu0 0
        %817 = vmatprep.subr.bf16.mxu0 0
        %818 = vmatpush1.bf16.msra.mxu0 0
        %819 = vmatprep.subr.bf16.mxu0 0
        %820 = vmatpush1.bf16.msra.mxu0 0
        %821 = vmatprep.subr.bf16.mxu0 0
        %822 = vmatpush1.bf16.msra.mxu0 0
        %823 = vmatprep.subr.bf16.mxu0 0
        %824 = vmatpush1.bf16.msra.mxu0 0
        %825 = vmatprep.subr.bf16.mxu0 0
        %826 = vmatpush1.bf16.msra.mxu0 0
        %827 = vmatprep.mubr.bf16.mxu0 0
        %828 = vmatmul.mubr.bf16.gmra.mrb[0].mxu0 %v786
        %v829 = vpop.f32.mrb[0].mxu0
        %v830 = vadd.f32 0.0, %v829
        %v831 = vpop.f32.mrb[0].mxu0
        %v832 = vadd.f32 0.0, %v831
        %v833 = vpop.f32.mrb[0].mxu0
        %v834 = vadd.f32 0.0, %v833
        %v835 = vpop.f32.mrb[0].mxu0
        %v836 = vadd.f32 0.0, %v835
        %837 = vdwg.mxu0
        %v839 = vsel %vm525, %v784, 0
        %v842 = vsel %vm788, %v301, 0
        %v845 = vsel %vm788, %v782, 0
        %847 = vmatprep.subr.bf16.mxu0 %v845
        %848 = vmatpush1.bf16.msra.mxu0 %v842
        %849 = vmatprep.subr.bf16.mxu0 0
        %850 = vmatpush1.bf16.msra.mxu0 0
        %851 = vmatprep.subr.bf16.mxu0 0
        %852 = vmatpush1.bf16.msra.mxu0 0
        %853 = vmatprep.subr.bf16.mxu0 0
        %854 = vmatpush1.bf16.msra.mxu0 0
        %855 = vmatprep.subr.bf16.mxu0 0
        %856 = vmatpush1.bf16.msra.mxu0 0
        %857 = vmatprep.subr.bf16.mxu0 0
        %858 = vmatpush1.bf16.msra.mxu0 0
        %859 = vmatprep.subr.bf16.mxu0 0
        %860 = vmatpush1.bf16.msra.mxu0 0
        %861 = vmatprep.subr.bf16.mxu0 0
        %862 = vmatpush1.bf16.msra.mxu0 0
        %863 = vmatprep.subr.bf16.mxu0 0
        %864 = vmatpush1.bf16.msra.mxu0 0
        %865 = vmatprep.subr.bf16.mxu0 0
        %866 = vmatpush1.bf16.msra.mxu0 0
        %867 = vmatprep.subr.bf16.mxu0 0
        %868 = vmatpush1.bf16.msra.mxu0 0
        %869 = vmatprep.subr.bf16.mxu0 0
        %870 = vmatpush1.bf16.msra.mxu0 0
        %871 = vmatprep.subr.bf16.mxu0 0
        %872 = vmatpush1.bf16.msra.mxu0 0
        %873 = vmatprep.subr.bf16.mxu0 0
        %874 = vmatpush1.bf16.msra.mxu0 0
        %875 = vmatprep.subr.bf16.mxu0 0
        %876 = vmatpush1.bf16.msra.mxu0 0
        %877 = vmatprep.subr.bf16.mxu0 0
        %878 = vmatpush1.bf16.msra.mxu0 0
        %879 = vmatprep.mubr.bf16.mxu0 0
        %880 = vmatmul.mubr.bf16.gmra.mrb[0].mxu0 %v839
        %v881 = vpop.f32.mrb[0].mxu0
        %v882 = vadd.f32 0.0, %v881
        %v883 = vpop.f32.mrb[0].mxu0
        %v884 = vadd.f32 0.0, %v883
        %v885 = vpop.f32.mrb[0].mxu0
        %v886 = vadd.f32 0.0, %v885
        %v887 = vpop.f32.mrb[0].mxu0
        %v888 = vadd.f32 0.0, %v887
        %889 = vdwg.mxu0
        %890 = vst [vmem:[%s268] sm:$0xf] %v296
        %891 = vst [vmem:[%s268 + $0x10] sm:$0xf] %v297
        %892 = vst [vmem:[%s268 + $0x20] sm:$0xf] %v298
        %893 = vst [vmem:[%s268 + $0x30] sm:$0xf] %v299
        %v894 = vpack.c.bf16 %v834, %v830
        %v895 = vpack.c.bf16 %v886, %v882
        %v898 = vunpack.c.l.b16 %v894
        %v899 = vunpack.c.h.b16 %v894
        %v900 = vunpack.c.l.b16 %v895
        %v901 = vunpack.c.h.b16 %v895
        %v902 = vpack.c.b16 %v898, %v898
        %v903 = vpack.c.b16 %v899, %v899
        %v904 = vpack.c.b16 %v900, %v900
        %v905 = vpack.c.b16 %v901, %v901
        %910 = vst [vmem:[%s268 + $0x4] sm:$0xf] %v902
        %911 = vst [vmem:[%s268 + $0x14] sm:$0xf] %v903
        %912 = vst [vmem:[%s268 + $0x24] sm:$0xf] %v904
        %913 = vst [vmem:[%s268 + $0x34] sm:$0xf] %v905
        %v914 = vmul.f32 %v302, %v830
        %v915 = vmul.f32 %v303, %v834
        %v916 = vmul.f32 %v304, %v882
        %v917 = vmul.f32 %v305, %v886
        %v918 = vpack.c.bf16 %v915, %v914
        %v919 = vpack.c.bf16 %v917, %v916
        %v922 = vunpack.c.l.b16 %v918
        %v923 = vunpack.c.h.b16 %v918
        %v924 = vunpack.c.l.b16 %v919
        %v925 = vunpack.c.h.b16 %v919
        %v926 = vpack.c.b16 %v922, %v922
        %v927 = vpack.c.b16 %v923, %v923
        %v928 = vpack.c.b16 %v924, %v924
        %v929 = vpack.c.b16 %v925, %v925
        %934 = vst [vmem:[%s268 + $0x8] sm:$0xf] %v926
        %935 = vst [vmem:[%s268 + $0x18] sm:$0xf] %v927
        %936 = vst [vmem:[%s268 + $0x28] sm:$0xf] %v928
        %937 = vst [vmem:[%s268 + $0x38] sm:$0xf] %v929
        %v938 = vmul.f32 %v302, %v832
        %v939 = vmul.f32 %v303, %v836
        %v940 = vmul.f32 %v304, %v884
        %v941 = vmul.f32 %v305, %v888
        %v942 = vpack.c.bf16 %v939, %v938
        %v943 = vpack.c.bf16 %v941, %v940
        %v946 = vunpack.c.l.b16 %v942
        %v947 = vunpack.c.h.b16 %v942
        %v948 = vunpack.c.l.b16 %v943
        %v949 = vunpack.c.h.b16 %v943
        %v950 = vpack.c.b16 %v946, %v946
        %v951 = vpack.c.b16 %v947, %v947
        %v952 = vpack.c.b16 %v948, %v948
        %v953 = vpack.c.b16 %v949, %v949
        %958 = vst [vmem:[%s268 + $0xc] sm:$0xf] %v950
        %959 = vst [vmem:[%s268 + $0x1c] sm:$0xf] %v951
        %960 = vst [vmem:[%s268 + $0x2c] sm:$0xf] %v952
        %961 = vst [vmem:[%s268 + $0x3c] sm:$0xf] %v953
        %s962 = sand.u32 %s152, 1
        %s963 = scalar_lea.sflag [#allocation3], %s962
        %s964 = sand.u32 %s152, 1
        %s965 = smul.addr %s964, 64
        %s966 = scalar_lea.vmem [#allocation2], %s965
        // Predicated region
        $region41: #{tpu_custom_call.1} parent=39 // pred_check
          %p967 = pneg %p162
        $region42: #{tpu_custom_call.1} parent=39 // pred_check_branch
          %969 = sbr.rel (%p967) target = $region44
        $region43: #{tpu_custom_call.1} parent=39 // pred_region
          %s970 = smul.u32 2, %s19
          %s972 = ssub.s32 1024, 1024
          %973 = vsyncadd %s963, %s972
          %s974 = smul.addr %s970, 8
          %s975 = smul.addr %s974, 64
          %s976 = scalar_lea.hbm %s5, %s975
          %s977 = sshll.u32 %s966, 4
          %s978 = int_to_ptr.vmem [resolvable:$true] %s977
          %983 = dma.vmem_to_hbm [thread:$0]  %s978, 1024, %s976, %s963, 256, 256, 16
        $region44: #{tpu_custom_call.1} parent=39 // pred_fallthru
          _
      $region40: #{tpu_custom_call.1} parent=5 // pred_fallthru
        _
      %p984 = scmp.le.s32.totalorder 2, %s14
      // Predicated region
      $region45: #{tpu_custom_call.1} parent=5 // pred_check
        %p985 = pneg %p984
      $region46: #{tpu_custom_call.1} parent=5 // pred_check_branch
        %987 = sbr.rel (%p985) target = $region48
      $region47: #{tpu_custom_call.1} parent=5 // pred_region
        %s988 = ssub.s32 %s14, 2
        // Predicated region
        $region49: #{tpu_custom_call.1} parent=47 // pred_check
          %p989 = pneg %p168
        $region50: #{tpu_custom_call.1} parent=47 // pred_check_branch
          %991 = sbr.rel (%p989) target = $region52
        $region51: #{tpu_custom_call.1} parent=47 // pred_region
          %s992 = sand.u32 %s153, 1
          %s993 = scalar_lea.sflag [#allocation3], %s992
          %s994 = sand.u32 %s153, 1
          %s995 = smul.addr %s994, 64
          %s996 = scalar_lea.vmem [#allocation2], %s995
          %997 = dma.done %s993, 1024
        $region52: #{tpu_custom_call.1} parent=47 // pred_fallthru
          _
      $region48: #{tpu_custom_call.1} parent=5 // pred_fallthru
        _
    $region6: #{tpu_custom_call.1} parent=1 // loop_footer
      %s18 = sadd.s32 1, %s14
    $region7: #{tpu_custom_call.1} parent=1 // loop_footer_branch
      %13 = sbr.rel target = $region3
    $region8: #{tpu_custom_call.1} parent=1 // loop_exit
      _
    %998 = vsyncpa [#allocation3], 1
    %s999 = scalar_lea.sflag [#allocation3], 1
    %1000 = vsyncpa %s999, 1

</llo_original>
